<compile_context>
chip_gen: v6e
topology: v6e:2x2x1
jax: 0.10.0
libtpu: 0.0.40
codegen_flags: <defaults>
</compile_context>

<pallas_src>
import functools

import jax
import jax.numpy as jnp
from jax.experimental import pallas as pl
from jax.experimental.pallas import tpu as pltpu

LANE = 128
SUBLANE = 8


def _round_up(x, m):
    return (x + m - 1) // m * m


def ae5_kernel(x_ref, y_ref, w1_ref, b1_ref, w2_ref, b2_ref,
               yprd_ref, lpart_ref, *, tb, b_actual, matmul_dtype):
    # Encoder: Linear + ReLU (MXU matmul, f32 accumulation).
    h = jnp.dot(x_ref[...], w1_ref[...],
                preferred_element_type=jnp.float32) + b1_ref[...]
    h = jnp.maximum(h, 0.0)

    # Decoder: Linear -> logits z. Sigmoid only for the Y_prd output.
    z = jnp.dot(h.astype(matmul_dtype), w2_ref[...],
                preferred_element_type=jnp.float32) + b2_ref[...]
    yprd_ref[...] = jax.nn.sigmoid(z).astype(yprd_ref.dtype)

    # BCE from logits with one stable softplus:
    #   softplus(-z) = max(-z, 0) + log(1 + exp(-|z|))
    t = y_ref[...]
    softplus_neg_z = jnp.maximum(-z, 0.0) + jnp.log(1.0 + jnp.exp(-jnp.abs(z)))
    bce = softplus_neg_z + (1.0 - t) * z           # (TB, D_out_pad)

    # Mask rows that are batch padding (compile-time decision: only emitted when
    # B is not a multiple of the tile size).
    if b_actual % tb != 0:
        row = (jax.lax.broadcasted_iota(jnp.int32, bce.shape, 0)
               + pl.program_id(0) * tb)
        bce = jnp.where(row < b_actual, bce, 0.0)

    # Per-tile column partial sums (lane-dense store). Padded feature columns are
    # sliced off outside; lane reduction + /D_out normalization happen outside too.
    lpart_ref[...] = jnp.sum(bce, axis=0, keepdims=True)


def ae5_forward(x, y, w1, b1, w2, b2, *, block_rows=256,
                matmul_dtype=jnp.float32):
    """Returns (Y_prd (B, D_out) f32, scalar loss)."""
    B, D_in = x.shape
    _, D_out = y.shape
    H = w1.shape[1]

    # Lane-dense padding of feature dims; batch tiled in multiples of 8.
    d_in_p = _round_up(D_in, LANE)
    h_p = _round_up(H, LANE)
    d_out_p = _round_up(D_out, LANE)
    tb = min(_round_up(block_rows, SUBLANE), _round_up(B, SUBLANE))
    b_p = _round_up(B, tb)
    grid = b_p // tb

    f32 = jnp.float32
    xp = jnp.zeros((b_p, d_in_p), matmul_dtype).at[:B, :D_in].set(
        x.astype(matmul_dtype))
    yp = jnp.zeros((b_p, d_out_p), f32).at[:B, :D_out].set(y.astype(f32))
    w1p = jnp.zeros((d_in_p, h_p), matmul_dtype).at[:D_in, :H].set(
        w1.astype(matmul_dtype))
    b1p = jnp.zeros((1, h_p), f32).at[:, :H].set(b1.astype(f32).reshape(1, H))
    w2p = jnp.zeros((h_p, d_out_p), matmul_dtype).at[:H, :D_out].set(
        w2.astype(matmul_dtype))
    b2p = jnp.zeros((1, d_out_p), f32).at[:, :D_out].set(
        b2.astype(f32).reshape(1, D_out))

    kernel = functools.partial(ae5_kernel, tb=tb, b_actual=B,
                               matmul_dtype=matmul_dtype)

    in_itemsize = jnp.dtype(matmul_dtype).itemsize
    flops = 2 * b_p * (d_in_p * h_p + h_p * d_out_p)
    transcendentals = 3 * b_p * d_out_p            # sigmoid exp + softplus exp/log
    bytes_accessed = (b_p * d_in_p * in_itemsize            # X
                      + b_p * d_out_p * 4                    # Y targets
                      + b_p * d_out_p * 4                    # Y_prd
                      + (d_in_p * h_p + h_p * d_out_p) * in_itemsize
                      + (h_p + d_out_p) * 4
                      + grid * d_out_p * 4)

    y_prd_p, loss_parts = pl.pallas_call(
        kernel,
        grid=(grid,),
        out_shape=(
            jax.ShapeDtypeStruct((b_p, d_out_p), f32),
            jax.ShapeDtypeStruct((grid, d_out_p), f32),
        ),
        in_specs=[
            pl.BlockSpec((tb, d_in_p), lambda i: (i, 0)),    # X tile
            pl.BlockSpec((tb, d_out_p), lambda i: (i, 0)),   # Y tile
            pl.BlockSpec((d_in_p, h_p), lambda i: (0, 0)),   # W1 (pinned)
            pl.BlockSpec((1, h_p), lambda i: (0, 0)),        # b1 (pinned)
            pl.BlockSpec((h_p, d_out_p), lambda i: (0, 0)),  # W2 (pinned)
            pl.BlockSpec((1, d_out_p), lambda i: (0, 0)),    # b2 (pinned)
        ],
        out_specs=(
            pl.BlockSpec((tb, d_out_p), lambda i: (i, 0)),   # Y_prd tile
            pl.BlockSpec((1, d_out_p), lambda i: (i, 0)),    # per-tile loss partials
        ),
        compiler_params=pltpu.CompilerParams(
            dimension_semantics=("parallel",),
        ),
        cost_estimate=pl.CostEstimate(
            flops=flops,
            transcendentals=transcendentals,
            bytes_accessed=bytes_accessed,
        ),
    )(xp, yp, w1p, b1p, w2p, b2p)

    y_prd = y_prd_p[:B, :D_out]
    loss = jnp.sum(loss_parts[:, :D_out]) / jnp.float32(D_out)
    return y_prd, loss


def init_params(key, D_in, H, D_out):
    """Deterministic init, mimicking torch.nn.Linear's U(-1/sqrt(fan_in), ...)."""
    k1, k2, k3, k4 = jax.random.split(key, 4)
    lim1 = 1.0 / (D_in ** 0.5)
    lim2 = 1.0 / (H ** 0.5)
    w1 = jax.random.uniform(k1, (D_in, H), jnp.float32, -lim1, lim1)
    b1 = jax.random.uniform(k2, (1, H), jnp.float32, -lim1, lim1)
    w2 = jax.random.uniform(k3, (H, D_out), jnp.float32, -lim2, lim2)
    b2 = jax.random.uniform(k4, (1, D_out), jnp.float32, -lim2, lim2)
    return w1, b1, w2, b2


if __name__ == "__main__":
    # Small shapes implied by the module: Linear(D_in, H) -> Linear(H, D_out).
    B, D_in, H, D_out = 8, 32, 16, 32

    key = jax.random.PRNGKey(0)
    kx, ky, kp = jax.random.split(key, 3)
    X = jax.random.uniform(kx, (B, D_in), jnp.float32)
    Y = jax.random.uniform(ky, (B, D_out), jnp.float32)   # BCE targets in [0, 1]
    w1, b1, w2, b2 = init_params(kp, D_in, H, D_out)

    # f32 path (checked tightly against the reference).
    y_prd, loss = ae5_forward(X, Y, w1, b1, w2, b2)
    jax.block_until_ready((y_prd, loss))

    # Pure-JAX reference (torch-faithful clamped-log BCE).
    h_ref = jnp.maximum(X @ w1 + b1, 0.0)
    p_ref = jax.nn.sigmoid(h_ref @ w2 + b2)
    bce_ref = -(Y * jnp.maximum(jnp.log(p_ref), -100.0)
                + (1.0 - Y) * jnp.maximum(jnp.log(1.0 - p_ref), -100.0))
    loss_ref = bce_ref.mean(axis=1).sum()
    assert jnp.allclose(y_prd, p_ref, atol=1e-5), "Y_prd mismatch (f32)"
    assert jnp.allclose(loss, loss_ref, atol=1e-4, rtol=1e-5), "loss mismatch (f32)"

    # bf16 matmul-input path (v6e/v7x HBM/MXU optimization); looser tolerance.
    y_prd_bf, loss_bf = ae5_forward(X, Y, w1, b1, w2, b2,
                                    matmul_dtype=jnp.bfloat16)
    jax.block_until_ready((y_prd_bf, loss_bf))
    assert jnp.allclose(y_prd_bf, p_ref, atol=3e-2), "Y_prd mismatch (bf16)"
    assert jnp.allclose(loss_bf, loss_ref, atol=3e-2, rtol=3e-2), "loss mismatch (bf16)"

    print("KERNEL_OK")
</pallas_src>

<mosaic_0001>
module attributes {stable_mosaic.version = 11 : i64} {
  func.func @ae5_kernel(%arg0: i32, %arg1: memref<8x128xf32, #tpu.memory_space<vmem>>, %arg2: memref<8x128xf32, #tpu.memory_space<vmem>>, %arg3: memref<128x128xf32, #tpu.memory_space<vmem>>, %arg4: memref<1x128xf32, #tpu.memory_space<vmem>>, %arg5: memref<128x128xf32, #tpu.memory_space<vmem>>, %arg6: memref<1x128xf32, #tpu.memory_space<vmem>>, %arg7: memref<8x128xf32, #tpu.memory_space<vmem>>, %arg8: memref<1x128xf32, #tpu.memory_space<vmem>>) attributes {dimension_semantics = [#tpu.dimension_semantics<parallel>], iteration_bounds = array<i64: 1>, scalar_prefetch = 0 : i64, scratch_operands = 0 : i64, tpu.core_type = #tpu.core_type<tc>, window_params = [{transform_indices = @transform_0, window_bounds = array<i64: 8, 128>}, {transform_indices = @transform_1, window_bounds = array<i64: 8, 128>}, {pipeline_mode = #tpu.pipeline_mode<synchronous>, transform_indices = @transform_2, window_bounds = array<i64: 128, 128>}, {pipeline_mode = #tpu.pipeline_mode<synchronous>, transform_indices = @transform_3, window_bounds = array<i64: 1, 128>}, {pipeline_mode = #tpu.pipeline_mode<synchronous>, transform_indices = @transform_4, window_bounds = array<i64: 128, 128>}, {pipeline_mode = #tpu.pipeline_mode<synchronous>, transform_indices = @transform_5, window_bounds = array<i64: 1, 128>}, {transform_indices = @transform_6, window_bounds = array<i64: 8, 128>}, {transform_indices = @transform_7, window_bounds = array<i64: 1, 128>}]} {
    %c0 = arith.constant 0 : index
    %c0_0 = arith.constant 0 : index
    %0 = vector.load %arg1[%c0, %c0_0] : memref<8x128xf32, #tpu.memory_space<vmem>>, vector<8x128xf32>
    %c0_1 = arith.constant 0 : index
    %c0_2 = arith.constant 0 : index
    %1 = vector.load %arg3[%c0_1, %c0_2] : memref<128x128xf32, #tpu.memory_space<vmem>>, vector<128x128xf32>
    %cst = arith.constant dense<0.000000e+00> : vector<8x128xf32>
    %2 = tpu.matmul %0, %1, %cst {dimension_numbers = #tpu.dot_dimension_numbers<[1], [0], [0], [1], [0, 0, 1, 1], [], []>} : vector<8x128xf32>, vector<128x128xf32>, vector<8x128xf32> -> vector<8x128xf32>
    %c0_3 = arith.constant 0 : index
    %c0_4 = arith.constant 0 : index
    %3 = vector.load %arg4[%c0_3, %c0_4] : memref<1x128xf32, #tpu.memory_space<vmem>>, vector<1x128xf32>
    %4 = vector.broadcast %3 : vector<1x128xf32> to vector<8x128xf32>
    %5 = arith.addf %2, %4 : vector<8x128xf32>
    %cst_5 = arith.constant 0.000000e+00 : f32
    %6 = vector.broadcast %cst_5 : f32 to vector<8x128xf32>
    %7 = arith.maximumf %5, %6 : vector<8x128xf32>
    %c0_6 = arith.constant 0 : index
    %c0_7 = arith.constant 0 : index
    %8 = vector.load %arg5[%c0_6, %c0_7] : memref<128x128xf32, #tpu.memory_space<vmem>>, vector<128x128xf32>
    %cst_8 = arith.constant dense<0.000000e+00> : vector<8x128xf32>
    %9 = tpu.matmul %7, %8, %cst_8 {dimension_numbers = #tpu.dot_dimension_numbers<[1], [0], [0], [1], [0, 0, 1, 1], [], []>} : vector<8x128xf32>, vector<128x128xf32>, vector<8x128xf32> -> vector<8x128xf32>
    %c0_9 = arith.constant 0 : index
    %c0_10 = arith.constant 0 : index
    %10 = vector.load %arg6[%c0_9, %c0_10] : memref<1x128xf32, #tpu.memory_space<vmem>>, vector<1x128xf32>
    %11 = vector.broadcast %10 : vector<1x128xf32> to vector<8x128xf32>
    %12 = arith.addf %9, %11 : vector<8x128xf32>
    %13 = arith.negf %12 : vector<8x128xf32>
    %14 = math.exp %13 : vector<8x128xf32>
    %cst_11 = arith.constant 1.000000e+00 : f32
    %15 = vector.broadcast %cst_11 : f32 to vector<8x128xf32>
    %16 = arith.addf %15, %14 : vector<8x128xf32>
    %17 = arith.divf %15, %16 : vector<8x128xf32>
    %c0_12 = arith.constant 0 : index
    %c0_13 = arith.constant 0 : index
    %18 = vector.load %arg7[%c0_12, %c0_13] : memref<8x128xf32, #tpu.memory_space<vmem>>, vector<8x128xf32>
    tpu.vector_store %arg7[%c0_12, %c0_13], %17 {strides = array<i32>} : memref<8x128xf32, #tpu.memory_space<vmem>>, vector<8x128xf32>,
    %c0_14 = arith.constant 0 : index
    %c0_15 = arith.constant 0 : index
    %19 = vector.load %arg2[%c0_14, %c0_15] : memref<8x128xf32, #tpu.memory_space<vmem>>, vector<8x128xf32>
    %cst_16 = arith.constant 0.000000e+00 : f32
    %20 = vector.broadcast %cst_16 : f32 to vector<8x128xf32>
    %21 = arith.subf %20, %12 : vector<8x128xf32>
    %cst_17 = arith.constant 0.000000e+00 : f32
    %22 = vector.broadcast %cst_17 : f32 to vector<8x128xf32>
    %23 = arith.maximumf %21, %22 : vector<8x128xf32>
    %24 = math.absf %12 : vector<8x128xf32>
    %cst_18 = arith.constant 0.000000e+00 : f32
    %25 = vector.broadcast %cst_18 : f32 to vector<8x128xf32>
    %26 = arith.subf %25, %24 : vector<8x128xf32>
    %27 = math.exp %26 : vector<8x128xf32>
    %cst_19 = arith.constant 1.000000e+00 : f32
    %28 = vector.broadcast %cst_19 : f32 to vector<8x128xf32>
    %29 = arith.addf %28, %27 : vector<8x128xf32>
    %30 = math.log %29 : vector<8x128xf32>
    %31 = arith.addf %23, %30 : vector<8x128xf32>
    %cst_20 = arith.constant 1.000000e+00 : f32
    %32 = vector.broadcast %cst_20 : f32 to vector<8x128xf32>
    %33 = arith.subf %32, %19 : vector<8x128xf32>
    %34 = arith.mulf %33, %12 : vector<8x128xf32>
    %35 = arith.addf %31, %34 : vector<8x128xf32>
    %cst_21 = arith.constant dense<0.000000e+00> : vector<128xf32>
    %36 = vector.multi_reduction <add>, %35, %cst_21 [0] : vector<8x128xf32> to vector<128xf32>
    %37 = vector.shape_cast %36 : vector<128xf32> to vector<1x128xf32>
    %c0_22 = arith.constant 0 : index
    %c0_23 = arith.constant 0 : index
    %38 = vector.load %arg8[%c0_22, %c0_23] : memref<1x128xf32, #tpu.memory_space<vmem>>, vector<1x128xf32>
    tpu.vector_store %arg8[%c0_22, %c0_23], %37 {strides = array<i32>} : memref<1x128xf32, #tpu.memory_space<vmem>>, vector<1x128xf32>,
    return
  }
  func.func @transform_0(%arg0: i32) -> (i32, i32) {
    %c0_i32 = arith.constant 0 : i32
    %c0_i32_0 = arith.constant 0 : i32
    return %arg0, %c0_i32 : i32, i32
  }
  func.func @transform_1(%arg0: i32) -> (i32, i32) {
    %c0_i32 = arith.constant 0 : i32
    %c0_i32_0 = arith.constant 0 : i32
    return %arg0, %c0_i32 : i32, i32
  }
  func.func @transform_2(%arg0: i32) -> (i32, i32) {
    %c0_i32 = arith.constant 0 : i32
    %c0_i32_0 = arith.constant 0 : i32
    %c0_i32_1 = arith.constant 0 : i32
    return %c0_i32, %c0_i32_0 : i32, i32
  }
  func.func @transform_3(%arg0: i32) -> (i32, i32) {
    %c0_i32 = arith.constant 0 : i32
    %c0_i32_0 = arith.constant 0 : i32
    %c0_i32_1 = arith.constant 0 : i32
    return %c0_i32, %c0_i32_0 : i32, i32
  }
  func.func @transform_4(%arg0: i32) -> (i32, i32) {
    %c0_i32 = arith.constant 0 : i32
    %c0_i32_0 = arith.constant 0 : i32
    %c0_i32_1 = arith.constant 0 : i32
    return %c0_i32, %c0_i32_0 : i32, i32
  }
  func.func @transform_5(%arg0: i32) -> (i32, i32) {
    %c0_i32 = arith.constant 0 : i32
    %c0_i32_0 = arith.constant 0 : i32
    %c0_i32_1 = arith.constant 0 : i32
    return %c0_i32, %c0_i32_0 : i32, i32
  }
  func.func @transform_6(%arg0: i32) -> (i32, i32) {
    %c0_i32 = arith.constant 0 : i32
    %c0_i32_0 = arith.constant 0 : i32
    return %arg0, %c0_i32 : i32, i32
  }
  func.func @transform_7(%arg0: i32) -> (i32, i32) {
    %c0_i32 = arith.constant 0 : i32
    %c0_i32_0 = arith.constant 0 : i32
    return %arg0, %c0_i32 : i32, i32
  }
}

</mosaic_0001>

<llo_original>
// kernel: tpu_custom_call.1
$region0: #{tpu_custom_call.1}
  #allocation0 [shape = 'u32[]', space=smem, size = 0x4, offset = 0x4, fixed_abs, tag = 'smem constant byte address 0x4 - core index']
  #allocation1 [shape = 'u32[144,128]{1,0:T(1,128)}', space=vmem, size = 0x12000, scoped, tag = 'internal scratch']
  %s0 = inlined_call_operand.hbm [shape: f32[8,128], index: 0, kind: input, shape index: {}]
  %s1 = inlined_call_operand.hbm [shape: f32[8,128], index: 1, kind: input, shape index: {}]
  %s2 = inlined_call_operand.hbm [shape: f32[128,128], index: 2, kind: input, shape index: {}]
  %s3 = inlined_call_operand.vmem [shape: f32[1,128], index: 3, kind: input, shape index: {}]
  %s4 = inlined_call_operand.hbm [shape: f32[128,128], index: 4, kind: input, shape index: {}]
  %s5 = inlined_call_operand.vmem [shape: f32[1,128], index: 5, kind: input, shape index: {}]
  %s6 = inlined_call_operand.hbm [shape: f32[8,128], index: 6, kind: output, shape index: {0}]
  %s7 = inlined_call_operand.hbm [shape: f32[1,128], index: 7, kind: output, shape index: {1}]
  %8 = xla_tuple %s6, %s7
  %s9 = sld [smem:[#allocation0]]
  $region58: #{tpu_custom_call.1} parent=0
    _
  %s11 = ssub.s32 1, %s9
  %s12 = scalar_select 0, %s11, %s9
  $region1: #{tpu_custom_call.1} parent=0
    #allocation2 [shape = 'u8[4096]{0}', space=vmem, size = 0x1000, scoped, tag = 'input window, operand 0, single buffered']
    #allocation3 [shape = 's32[1]{0}', space=sflag, size = 0x4, scoped, tag = 'scoped memory for tpu_custom_call.1']
    #allocation4 [shape = 's32[1]{0}', space=sflag, size = 0x4, scoped, tag = 'scoped memory for tpu_custom_call.1']
    #allocation5 [shape = 'u8[4096]{0}', space=vmem, size = 0x1000, scoped, tag = 'input window, operand 1, single buffered']
    #allocation6 [shape = 's32[1]{0}', space=sflag, size = 0x4, scoped, tag = 'scoped memory for tpu_custom_call.1']
    #allocation7 [shape = 'u8[65536]{0}', space=vmem, size = 0x10000, scoped, tag = 'input window, operand 2, single buffered']
    #allocation8 [shape = 'u8[65536]{0}', space=vmem, size = 0x10000, scoped, tag = 'input window, operand 4, single buffered']
    #allocation9 [shape = 's32[1]{0}', space=sflag, size = 0x4, scoped, tag = 'scoped memory for tpu_custom_call.1']
    #allocation10 [shape = 'u8[4096]{0}', space=vmem, size = 0x1000, scoped, tag = 'output window, operand 0, single buffered']
    #allocation11 [shape = 'u8[512]{0}', space=vmem, size = 0x400, scoped, tag = 'output window, operand 1, single buffered']
    #allocation12 [shape = 's32[1]{0}', space=sflag, size = 0x4, scoped, tag = 'scoped memory for tpu_custom_call.1']
    %13 = vsyncpa [#allocation3], 0
    %14 = vsyncpa [#allocation6], 0
    %15 = vsyncpa [#allocation9], 0
    %16 = vsyncpa [#allocation4], 0
    %17 = vsyncpa [#allocation12], 0
    // Predicated region
    $region2: #{tpu_custom_call.1} parent=1 // pred_check
      _
    $region3: #{tpu_custom_call.1} parent=1 // pred_check_branch
      %19 = sbr.rel (0) target = $region5
    $region4: #{tpu_custom_call.1} parent=1 // pred_region
      %s21 = ssub.s32 128, 128
      %22 = vsyncadd [#allocation3], %s21
      %s24 = sshll.u32 [#allocation2], 4
      %s25 = int_to_ptr.vmem [resolvable:$true] %s24
      %27 = dma.hbm_to_vmem [thread:$0]  %s0, 128, %s25, [#allocation3]
    $region5: #{tpu_custom_call.1} parent=1 // pred_fallthru
      _
    // Predicated region
    $region6: #{tpu_custom_call.1} parent=1 // pred_check
      _
    $region7: #{tpu_custom_call.1} parent=1 // pred_check_branch
      %29 = sbr.rel (0) target = $region9
    $region8: #{tpu_custom_call.1} parent=1 // pred_region
      %s31 = ssub.s32 128, 128
      %32 = vsyncadd [#allocation6], %s31
      %s34 = sshll.u32 [#allocation5], 4
      %s35 = int_to_ptr.vmem [resolvable:$true] %s34
      %37 = dma.hbm_to_vmem [thread:$0]  %s1, 128, %s35, [#allocation6]
    $region9: #{tpu_custom_call.1} parent=1 // pred_fallthru
      _
    // Predicated region
    $region10: #{tpu_custom_call.1} parent=1 // pred_check
      _
    $region11: #{tpu_custom_call.1} parent=1 // pred_check_branch
      %39 = sbr.rel (0) target = $region13
    $region12: #{tpu_custom_call.1} parent=1 // pred_region
      %s41 = ssub.s32 2048, 2048
      %42 = vsyncadd [#allocation6], %s41
      %s43 = sshll.u32 [#allocation7], 4
      %s44 = int_to_ptr.vmem [resolvable:$true] %s43
      %49 = dma.hbm_to_vmem [thread:$0]  %s2, 2048, %s44, [#allocation6], 128, 128, 8
    $region13: #{tpu_custom_call.1} parent=1 // pred_fallthru
      _
    // Predicated region
    $region14: #{tpu_custom_call.1} parent=1 // pred_check
      _
    $region15: #{tpu_custom_call.1} parent=1 // pred_check_branch
      %51 = sbr.rel (0) target = $region17
    $region16: #{tpu_custom_call.1} parent=1 // pred_region
      _
    $region17: #{tpu_custom_call.1} parent=1 // pred_fallthru
      _
    // Predicated region
    $region18: #{tpu_custom_call.1} parent=1 // pred_check
      _
    $region19: #{tpu_custom_call.1} parent=1 // pred_check_branch
      %53 = sbr.rel (0) target = $region21
    $region20: #{tpu_custom_call.1} parent=1 // pred_region
      %s55 = ssub.s32 2048, 2048
      %56 = vsyncadd [#allocation9], %s55
      %s57 = sshll.u32 [#allocation8], 4
      %s58 = int_to_ptr.vmem [resolvable:$true] %s57
      %63 = dma.hbm_to_vmem [thread:$0]  %s4, 2048, %s58, [#allocation9], 128, 128, 8
    $region21: #{tpu_custom_call.1} parent=1 // pred_fallthru
      _
    // Predicated region
    $region22: #{tpu_custom_call.1} parent=1 // pred_check
      _
    $region23: #{tpu_custom_call.1} parent=1 // pred_check_branch
      %65 = sbr.rel (0) target = $region25
    $region24: #{tpu_custom_call.1} parent=1 // pred_region
      _
    $region25: #{tpu_custom_call.1} parent=1 // pred_fallthru
      _
    // Predicated region
    $region26: #{tpu_custom_call.1} parent=1 // pred_check
      _
    $region27: #{tpu_custom_call.1} parent=1 // pred_check_branch
      %67 = sbr.rel (0) target = $region29
    $region28: #{tpu_custom_call.1} parent=1 // pred_region
      %68 = dma.done [#allocation3], 128
    $region29: #{tpu_custom_call.1} parent=1 // pred_fallthru
      _
    // Predicated region
    $region30: #{tpu_custom_call.1} parent=1 // pred_check
      _
    $region31: #{tpu_custom_call.1} parent=1 // pred_check_branch
      %70 = sbr.rel (0) target = $region33
    $region32: #{tpu_custom_call.1} parent=1 // pred_region
      %71 = dma.done [#allocation6], 128
    $region33: #{tpu_custom_call.1} parent=1 // pred_fallthru
      _
    // Predicated region
    $region34: #{tpu_custom_call.1} parent=1 // pred_check
      _
    $region35: #{tpu_custom_call.1} parent=1 // pred_check_branch
      %73 = sbr.rel (0) target = $region37
    $region36: #{tpu_custom_call.1} parent=1 // pred_region
      %74 = dma.done [#allocation6], 2048
    $region37: #{tpu_custom_call.1} parent=1 // pred_fallthru
      _
    // Predicated region
    $region38: #{tpu_custom_call.1} parent=1 // pred_check
      _
    $region39: #{tpu_custom_call.1} parent=1 // pred_check_branch
      %76 = sbr.rel (0) target = $region41
    $region40: #{tpu_custom_call.1} parent=1 // pred_region
      %77 = dma.done [#allocation9], 2048
    $region41: #{tpu_custom_call.1} parent=1 // pred_fallthru
      _
    %v78 = vld [vmem:[#allocation2] sm:$0xff]
    %v79 = vld [vmem:[#allocation7] sm:$0xff]
    %v80 = vld [vmem:[#allocation7 + $0x8] sm:$0xff]
    %v81 = vld [vmem:[#allocation7 + $0x10] sm:$0xff]
    %v82 = vld [vmem:[#allocation7 + $0x18] sm:$0xff]
    %v83 = vld [vmem:[#allocation7 + $0x20] sm:$0xff]
    %v84 = vld [vmem:[#allocation7 + $0x28] sm:$0xff]
    %v85 = vld [vmem:[#allocation7 + $0x30] sm:$0xff]
    %v86 = vld [vmem:[#allocation7 + $0x38] sm:$0xff]
    %v87 = vld [vmem:[#allocation7 + $0x40] sm:$0xff]
    %v88 = vld [vmem:[#allocation7 + $0x48] sm:$0xff]
    %v89 = vld [vmem:[#allocation7 + $0x50] sm:$0xff]
    %v90 = vld [vmem:[#allocation7 + $0x58] sm:$0xff]
    %v91 = vld [vmem:[#allocation7 + $0x60] sm:$0xff]
    %v92 = vld [vmem:[#allocation7 + $0x68] sm:$0xff]
    %v93 = vld [vmem:[#allocation7 + $0x70] sm:$0xff]
    %v94 = vld [vmem:[#allocation7 + $0x78] sm:$0xff]
    %v95 = vld [vmem:[%s3] sm:$0x1]
    %v97 = vlaneseq
    %v98 = vshrl.u32 %v97, 7
    %v99 = vsub.s32 0, %v98
    %v100 = vrot.slane %v95, %v99
    %102 = vmatprep.subr.mxu0 0.0
    %103 = vmatpush1.msra.mxu0 %v94
    %104 = vmatprep.subr.mxu0 0.0
    %105 = vmatpush1.msra.mxu0 %v93
    %106 = vmatprep.subr.mxu0 0.0
    %107 = vmatpush1.msra.mxu0 %v92
    %108 = vmatprep.subr.mxu0 0.0
    %109 = vmatpush1.msra.mxu0 %v91
    %110 = vmatprep.subr.mxu0 0.0
    %111 = vmatpush1.msra.mxu0 %v90
    %112 = vmatprep.subr.mxu0 0.0
    %113 = vmatpush1.msra.mxu0 %v89
    %114 = vmatprep.subr.mxu0 0.0
    %115 = vmatpush1.msra.mxu0 %v88
    %116 = vmatprep.subr.mxu0 0.0
    %117 = vmatpush1.msra.mxu0 %v87
    %118 = vmatprep.subr.mxu0 0.0
    %119 = vmatpush1.msra.mxu0 %v86
    %120 = vmatprep.subr.mxu0 0.0
    %121 = vmatpush1.msra.mxu0 %v85
    %122 = vmatprep.subr.mxu0 0.0
    %123 = vmatpush1.msra.mxu0 %v84
    %124 = vmatprep.subr.mxu0 0.0
    %125 = vmatpush1.msra.mxu0 %v83
    %126 = vmatprep.subr.mxu0 0.0
    %127 = vmatpush1.msra.mxu0 %v82
    %128 = vmatprep.subr.mxu0 0.0
    %129 = vmatpush1.msra.mxu0 %v81
    %130 = vmatprep.subr.mxu0 0.0
    %131 = vmatpush1.msra.mxu0 %v80
    %132 = vmatprep.subr.mxu0 0.0
    %133 = vmatpush1.msra.mxu0 %v79
    %134 = vmatprep.subr.mxu0 0.0
    %135 = vmatpush2.msra.mxu0 0.0
    %136 = vmatprep.subr.mxu0 0.0
    %137 = vmatpush2.msra.mxu0 0.0
    %138 = vmatprep.subr.mxu0 0.0
    %139 = vmatpush2.msra.mxu0 0.0
    %140 = vmatprep.subr.mxu0 0.0
    %141 = vmatpush2.msra.mxu0 0.0
    %142 = vmatprep.subr.mxu0 0.0
    %143 = vmatpush2.msra.mxu0 0.0
    %144 = vmatprep.subr.mxu0 0.0
    %145 = vmatpush2.msra.mxu0 0.0
    %146 = vmatprep.subr.mxu0 0.0
    %147 = vmatpush2.msra.mxu0 0.0
    %148 = vmatprep.subr.mxu0 0.0
    %149 = vmatpush2.msra.mxu0 0.0
    %150 = vmatprep.subr.mxu0 0.0
    %151 = vmatpush2.msra.mxu0 0.0
    %152 = vmatprep.subr.mxu0 0.0
    %153 = vmatpush2.msra.mxu0 0.0
    %154 = vmatprep.subr.mxu0 0.0
    %155 = vmatpush2.msra.mxu0 0.0
    %156 = vmatprep.subr.mxu0 0.0
    %157 = vmatpush2.msra.mxu0 0.0
    %158 = vmatprep.subr.mxu0 0.0
    %159 = vmatpush2.msra.mxu0 0.0
    %160 = vmatprep.subr.mxu0 0.0
    %161 = vmatpush2.msra.mxu0 0.0
    %162 = vmatprep.subr.mxu0 0.0
    %163 = vmatpush2.msra.mxu0 0.0
    %164 = vmatprep.subr.mxu0 0.0
    %165 = vmatpush2.msra.mxu0 0.0
    %166 = vmatprep.mubr.f32.mxu0 0.0
    %167 = vmatmul.mubr.f32.gmra.mxu0 %v78
    %v168 = vpop.f32.mrf.mxu0
    %v169 = vadd.f32 %v100, %v168
    %v170 = vpop.f32.mrf.mxu0
    %171 = vdwg.mxu0
    %v172 = vmax.f32 %v169, 0.0
    %v173 = vld [vmem:[#allocation8] sm:$0xff]
    %v174 = vld [vmem:[#allocation8 + $0x8] sm:$0xff]
    %v175 = vld [vmem:[#allocation8 + $0x10] sm:$0xff]
    %v176 = vld [vmem:[#allocation8 + $0x18] sm:$0xff]
    %v177 = vld [vmem:[#allocation8 + $0x20] sm:$0xff]
    %v178 = vld [vmem:[#allocation8 + $0x28] sm:$0xff]
    %v179 = vld [vmem:[#allocation8 + $0x30] sm:$0xff]
    %v180 = vld [vmem:[#allocation8 + $0x38] sm:$0xff]
    %v181 = vld [vmem:[#allocation8 + $0x40] sm:$0xff]
    %v182 = vld [vmem:[#allocation8 + $0x48] sm:$0xff]
    %v183 = vld [vmem:[#allocation8 + $0x50] sm:$0xff]
    %v184 = vld [vmem:[#allocation8 + $0x58] sm:$0xff]
    %v185 = vld [vmem:[#allocation8 + $0x60] sm:$0xff]
    %v186 = vld [vmem:[#allocation8 + $0x68] sm:$0xff]
    %v187 = vld [vmem:[#allocation8 + $0x70] sm:$0xff]
    %v188 = vld [vmem:[#allocation8 + $0x78] sm:$0xff]
    %v189 = vld [vmem:[%s5] sm:$0x1]
    %v191 = vlaneseq
    %v192 = vshrl.u32 %v191, 7
    %v193 = vsub.s32 0, %v192
    %v194 = vrot.slane %v189, %v193
    %196 = vmatprep.subr.mxu0 0.0
    %197 = vmatpush1.msra.mxu0 %v188
    %198 = vmatprep.subr.mxu0 0.0
    %199 = vmatpush1.msra.mxu0 %v187
    %200 = vmatprep.subr.mxu0 0.0
    %201 = vmatpush1.msra.mxu0 %v186
    %202 = vmatprep.subr.mxu0 0.0
    %203 = vmatpush1.msra.mxu0 %v185
    %204 = vmatprep.subr.mxu0 0.0
    %205 = vmatpush1.msra.mxu0 %v184
    %206 = vmatprep.subr.mxu0 0.0
    %207 = vmatpush1.msra.mxu0 %v183
    %208 = vmatprep.subr.mxu0 0.0
    %209 = vmatpush1.msra.mxu0 %v182
    %210 = vmatprep.subr.mxu0 0.0
    %211 = vmatpush1.msra.mxu0 %v181
    %212 = vmatprep.subr.mxu0 0.0
    %213 = vmatpush1.msra.mxu0 %v180
    %214 = vmatprep.subr.mxu0 0.0
    %215 = vmatpush1.msra.mxu0 %v179
    %216 = vmatprep.subr.mxu0 0.0
    %217 = vmatpush1.msra.mxu0 %v178
    %218 = vmatprep.subr.mxu0 0.0
    %219 = vmatpush1.msra.mxu0 %v177
    %220 = vmatprep.subr.mxu0 0.0
    %221 = vmatpush1.msra.mxu0 %v176
    %222 = vmatprep.subr.mxu0 0.0
    %223 = vmatpush1.msra.mxu0 %v175
    %224 = vmatprep.subr.mxu0 0.0
    %225 = vmatpush1.msra.mxu0 %v174
    %226 = vmatprep.subr.mxu0 0.0
    %227 = vmatpush1.msra.mxu0 %v173
    %228 = vmatprep.subr.mxu0 0.0
    %229 = vmatpush2.msra.mxu0 0.0
    %230 = vmatprep.subr.mxu0 0.0
    %231 = vmatpush2.msra.mxu0 0.0
    %232 = vmatprep.subr.mxu0 0.0
    %233 = vmatpush2.msra.mxu0 0.0
    %234 = vmatprep.subr.mxu0 0.0
    %235 = vmatpush2.msra.mxu0 0.0
    %236 = vmatprep.subr.mxu0 0.0
    %237 = vmatpush2.msra.mxu0 0.0
    %238 = vmatprep.subr.mxu0 0.0
    %239 = vmatpush2.msra.mxu0 0.0
    %240 = vmatprep.subr.mxu0 0.0
    %241 = vmatpush2.msra.mxu0 0.0
    %242 = vmatprep.subr.mxu0 0.0
    %243 = vmatpush2.msra.mxu0 0.0
    %244 = vmatprep.subr.mxu0 0.0
    %245 = vmatpush2.msra.mxu0 0.0
    %246 = vmatprep.subr.mxu0 0.0
    %247 = vmatpush2.msra.mxu0 0.0
    %248 = vmatprep.subr.mxu0 0.0
    %249 = vmatpush2.msra.mxu0 0.0
    %250 = vmatprep.subr.mxu0 0.0
    %251 = vmatpush2.msra.mxu0 0.0
    %252 = vmatprep.subr.mxu0 0.0
    %253 = vmatpush2.msra.mxu0 0.0
    %254 = vmatprep.subr.mxu0 0.0
    %255 = vmatpush2.msra.mxu0 0.0
    %256 = vmatprep.subr.mxu0 0.0
    %257 = vmatpush2.msra.mxu0 0.0
    %258 = vmatprep.subr.mxu0 0.0
    %259 = vmatpush2.msra.mxu0 0.0
    %260 = vmatprep.mubr.f32.mxu0 0.0
    %261 = vmatmul.mubr.f32.gmra.mxu0 %v172
    %v262 = vpop.f32.mrf.mxu0
    %v263 = vadd.f32 %v194, %v262
    %v264 = vpop.f32.mrf.mxu0
    %265 = vdwg.mxu0
    %v266 = vxor.u32 %v263, 2147483648
    %v267 = vmul.f32 %v266, 1.442695
    %v268 = vpow.pop %v267
    %v269 = vadd.f32 %v268, 1.0
    %v270 = vrcp.pop %v269
    %v271 = vmul.f32 1.0, %v270
    %272 = vst [vmem:[#allocation10] sm:$0xff] %v271
    %v273 = vld [vmem:[#allocation5] sm:$0xff]
    %v274 = vsub.f32 0.0, %v263
    %v275 = vmax.f32 %v274, 0.0
    %v276 = vand.u32 2147483647, %v263
    %v277 = vsub.f32 0.0, %v276
    %v278 = vmul.f32 %v277, 1.442695
    %v279 = vpow.pop %v278
    %v280 = vadd.f32 %v279, 1.0
    %v281 = vlog2.pop %v280
    %v282 = vmul.f32 %v281, 0.6931472
    %v283 = vadd.f32 %v275, %v282
    %v284 = vsub.f32 1.0, %v273
    %v285 = vmul.f32 %v284, %v263
    %v286 = vadd.f32 %v283, %v285
    %v287 = vrot.slane %v286, 4
    %v288 = vadd.f32 %v286, %v287
    %v289 = vrot.slane %v288, 2
    %v290 = vadd.f32 %v288, %v289
    %v291 = vrot.slane %v290, 1
    %v292 = vadd.f32 %v290, %v291
    %293 = vst [vmem:[#allocation11] sm:$0x1] %v292
    // Predicated region
    $region42: #{tpu_custom_call.1} parent=1 // pred_check
      _
    $region43: #{tpu_custom_call.1} parent=1 // pred_check_branch
      %295 = sbr.rel (0) target = $region45
    $region44: #{tpu_custom_call.1} parent=1 // pred_region
      %s297 = ssub.s32 128, 128
      %298 = vsyncadd [#allocation4], %s297
      %s300 = sshll.u32 [#allocation10], 4
      %s301 = int_to_ptr.vmem [resolvable:$true] %s300
      %303 = dma.vmem_to_hbm [thread:$0]  %s301, 128, %s6, [#allocation4]
    $region45: #{tpu_custom_call.1} parent=1 // pred_fallthru
      _
    // Predicated region
    $region46: #{tpu_custom_call.1} parent=1 // pred_check
      _
    $region47: #{tpu_custom_call.1} parent=1 // pred_check_branch
      %305 = sbr.rel (0) target = $region49
    $region48: #{tpu_custom_call.1} parent=1 // pred_region
      %s307 = ssub.s32 16, 16
      %308 = vsyncadd [#allocation12], %s307
      %s310 = sshll.u32 [#allocation11], 4
      %s311 = int_to_ptr.vmem [resolvable:$true] %s310
      %313 = dma.vmem_to_hbm [thread:$0]  %s311, 16, %s7, [#allocation12]
    $region49: #{tpu_custom_call.1} parent=1 // pred_fallthru
      _
    // Predicated region
    $region50: #{tpu_custom_call.1} parent=1 // pred_check
      _
    $region51: #{tpu_custom_call.1} parent=1 // pred_check_branch
      %315 = sbr.rel (0) target = $region53
    $region52: #{tpu_custom_call.1} parent=1 // pred_region
      %316 = dma.done [#allocation4], 128
    $region53: #{tpu_custom_call.1} parent=1 // pred_fallthru
      _
    // Predicated region
    $region54: #{tpu_custom_call.1} parent=1 // pred_check
      _
    $region55: #{tpu_custom_call.1} parent=1 // pred_check_branch
      %318 = sbr.rel (0) target = $region57
    $region56: #{tpu_custom_call.1} parent=1 // pred_region
      %319 = dma.done [#allocation12], 16
    $region57: #{tpu_custom_call.1} parent=1 // pred_fallthru
      _
    %320 = vsyncpa [#allocation3], 1
    %321 = vsyncpa [#allocation6], 1
    %322 = vsyncpa [#allocation9], 1
    %323 = vsyncpa [#allocation4], 1
    %324 = vsyncpa [#allocation12], 1

</llo_original>
